<compile_context>
chip_gen: v7x
topology: tpu7x:2x2x1
jax: 0.10.0
libtpu: 0.0.40
codegen_flags: <defaults>
</compile_context>

<pallas_src>
import functools

import jax
import jax.numpy as jnp
from jax.experimental import pallas as pl
from jax.experimental.pallas import tpu as pltpu

_SUBLANE = 8
_LANE = 128
_MIN_PIPELINE_BYTES = 1 << 20            # above this, force >= 4 grid steps


def _cdiv(a, b):
    return -(-a // b)


@functools.lru_cache(maxsize=1)
def _chip_params():
    """Per-generation (block_bytes, vmem_limit_bytes, tensorcores_per_chip)."""
    block_bytes = 4 * 1024 * 1024        # v5e/v6e: ~85% of HBM roofline plateau
    vmem_limit = 64 * 1024 * 1024        # well under 128 MiB physical VMEM
    num_cores = 1
    try:
        kind = jax.devices()[0].device_kind.lower()
    except Exception:
        kind = ""
    if "7" in kind:                      # v7x-family
        # 3.2 TB/s HBM -> bigger blocks to hide the ~0.35us/step overhead, but
        # only 64 MiB physical VMEM and 2 TensorCores per chip.
        block_bytes = 8 * 1024 * 1024
        vmem_limit = 48 * 1024 * 1024
        num_cores = 2
    return block_bytes, vmem_limit, num_cores


def _swish_kernel(x_ref, o_ref):
    x = x_ref[...]
    # bf16: keep the cheap muls/adds packed in bf16 (2 elems per lane pair on
    # v6e/v7x VPU); the single transcendental runs in f32 for accuracy.
    compute_dtype = x.dtype if x.dtype == jnp.bfloat16 else jnp.float32
    h = x.astype(compute_dtype) * 0.5
    t = jnp.tanh(h.astype(jnp.float32)).astype(compute_dtype)
    # x * sigmoid(x) == h * tanh(h) + h  with h = x/2   (exact identity)
    o_ref[...] = (h * t + h).astype(o_ref.dtype)


def _swish_jnp(x):
    """Same math as the kernel, for tiny tails that don't justify a DMA."""
    h = 0.5 * x.astype(jnp.float32)
    return (h * jnp.tanh(h) + h).astype(x.dtype)


def _pick_cols(n):
    """Widest lane count (multiple of 128, <= 8192) that divides n exactly."""
    top = (min(8192, n) // _LANE) * _LANE
    for cols in range(top, _LANE - 1, -_LANE):
        if n % cols == 0:
            return cols
    return _LANE  # unreachable: callers guarantee n % 128 == 0


def _even_steps_tile(rows, tile):
    """Best-effort shrink of `tile` so cdiv(rows, tile) is even (>= 2 TC shards)."""
    steps = _cdiv(rows, tile)
    if steps % 2 == 0:
        return tile
    target = steps + 1
    cand = max(_SUBLANE, _cdiv(_cdiv(rows, target), _SUBLANE) * _SUBLANE)
    cand = min(cand, rows)
    if cand < rows and _cdiv(rows, cand) % 2 == 0:
        return cand
    return tile


def _pick_tile_rows(rows, cols, itemsize, block_bytes, num_cores):
    """Block rows: ~block_bytes per block, multiple of 8 (or == rows), with
    enough grid steps for pipelining and (on v7x) for both TensorCores."""
    row_bytes = cols * itemsize
    total_bytes = rows * row_bytes
    # Byte-target tile (multiple of 8 sublanes).
    tile = max(_SUBLANE, (block_bytes // row_bytes) // _SUBLANE * _SUBLANE)
    # Keep the pipeline busy: once the tensor is big enough to care about,
    # require >= 4 grid steps (and >= 2 per TensorCore on multi-TC chips).
    if total_bytes > _MIN_PIPELINE_BYTES:
        min_steps = max(4, 2 * num_cores)
        cap = max(_SUBLANE, (rows // min_steps) // _SUBLANE * _SUBLANE)
        tile = min(tile, cap)
    tile = min(tile, rows)
    # On multi-TC chips, prefer an even step count so "parallel" shards evenly.
    if num_cores > 1 and rows > _SUBLANE:
        tile = _even_steps_tile(rows, tile)
    return tile


def _swish_flat(x_flat):
    """Run the Pallas kernel on a 1-D array whose size is a multiple of 128."""
    n = x_flat.shape[0]
    cols = _pick_cols(n)
    rows = n // cols
    x2d = x_flat.reshape(rows, cols)

    block_bytes, vmem_limit, num_cores = _chip_params()
    tile_rows = _pick_tile_rows(rows, cols, x_flat.dtype.itemsize,
                                block_bytes, num_cores)
    grid = (_cdiv(rows, tile_rows),)

    out2d = pl.pallas_call(
        _swish_kernel,
        out_shape=jax.ShapeDtypeStruct((rows, cols), x_flat.dtype),
        grid_spec=pltpu.PrefetchScalarGridSpec(
            num_scalar_prefetch=0,
            grid=grid,
            in_specs=[pl.BlockSpec((tile_rows, cols), lambda i: (i, 0))],
            out_specs=pl.BlockSpec((tile_rows, cols), lambda i: (i, 0)),
        ),
        compiler_params=pltpu.CompilerParams(
            dimension_semantics=("parallel",),
            vmem_limit_bytes=vmem_limit,
        ),
    )(x2d)
    return out2d.reshape(-1)


@jax.jit
def swish(x):
    """Elementwise swish (x * sigmoid(x)) via a Pallas TPU kernel. Any shape/dtype."""
    orig_shape = x.shape
    n = x.size
    if n == 0:
        return x

    x_flat = jnp.ravel(x)
    n_main = (n // _LANE) * _LANE

    if n_main == n:
        # Common path: element count divisible by the 128-lane width -> zero
        # padding, zero extra copies.
        return _swish_flat(x_flat).reshape(orig_shape)

    # Rare fallback (n not a multiple of 128): kernel on the aligned prefix,
    # plain-jnp on the <128-element tail. Avoids whole-tensor pad/slice copies.
    tail_out = _swish_jnp(x_flat[n_main:])
    if n_main == 0:
        return tail_out.reshape(orig_shape)
    main_out = _swish_flat(x_flat[:n_main])
    return jnp.concatenate([main_out, tail_out]).reshape(orig_shape)


if __name__ == "__main__":
    key = jax.random.PRNGKey(0)
    # Small NCHW activation consistent with typical usage of Swish.
    x = jax.random.normal(key, (2, 4, 16, 16), dtype=jnp.float32)

    y = jax.block_until_ready(swish(x))
    ref = x * jax.nn.sigmoid(x)
    assert y.shape == x.shape and y.dtype == x.dtype
    assert jnp.allclose(y, ref, atol=1e-5, rtol=1e-5)

    # Exercise the non-128-multiple fallback paths (prefix+tail, and tail-only).
    x2 = jax.random.normal(jax.random.PRNGKey(1), (3, 50), dtype=jnp.float32)
    y2 = jax.block_until_ready(swish(x2))
    assert jnp.allclose(y2, x2 * jax.nn.sigmoid(x2), atol=1e-5, rtol=1e-5)

    x3 = jax.random.normal(jax.random.PRNGKey(2), (3, 5, 7), dtype=jnp.float32)
    y3 = jax.block_until_ready(swish(x3))
    assert jnp.allclose(y3, x3 * jax.nn.sigmoid(x3), atol=1e-5, rtol=1e-5)

    print("KERNEL_OK")
</pallas_src>

<mosaic_0001>
module attributes {stable_mosaic.version = 11 : i64} {
  func.func @_swish_kernel(%arg0: i32, %arg1: memref<1x2048xf32, #tpu.memory_space<vmem>>, %arg2: memref<1x2048xf32, #tpu.memory_space<vmem>>) attributes {dimension_semantics = [#tpu.dimension_semantics<parallel>], iteration_bounds = array<i64: 1>, scalar_prefetch = 0 : i64, scratch_operands = 0 : i64, tpu.core_type = #tpu.core_type<tc>, window_params = [{transform_indices = @transform_0, window_bounds = array<i64: 1, 2048>}, {transform_indices = @transform_1, window_bounds = array<i64: 1, 2048>}]} {
    %c0 = arith.constant 0 : index
    %c0_0 = arith.constant 0 : index
    %0 = vector.load %arg1[%c0, %c0_0] : memref<1x2048xf32, #tpu.memory_space<vmem>>, vector<1x2048xf32>
    %cst = arith.constant 5.000000e-01 : f32
    %1 = vector.broadcast %cst : f32 to vector<1x2048xf32>
    %2 = arith.mulf %0, %1 : vector<1x2048xf32>
    %3 = math.tanh %2 : vector<1x2048xf32>
    %4 = arith.mulf %2, %3 : vector<1x2048xf32>
    %5 = arith.addf %4, %2 : vector<1x2048xf32>
    %c0_1 = arith.constant 0 : index
    %c0_2 = arith.constant 0 : index
    %6 = vector.load %arg2[%c0_1, %c0_2] : memref<1x2048xf32, #tpu.memory_space<vmem>>, vector<1x2048xf32>
    tpu.vector_store %arg2[%c0_1, %c0_2], %5 {strides = array<i32>} : memref<1x2048xf32, #tpu.memory_space<vmem>>, vector<1x2048xf32>,
    return
  }
  func.func @transform_0(%arg0: i32) -> (i32, i32) {
    %c0_i32 = arith.constant 0 : i32
    %c0_i32_0 = arith.constant 0 : i32
    return %arg0, %c0_i32 : i32, i32
  }
  func.func @transform_1(%arg0: i32) -> (i32, i32) {
    %c0_i32 = arith.constant 0 : i32
    %c0_i32_0 = arith.constant 0 : i32
    return %arg0, %c0_i32 : i32, i32
  }
}

</mosaic_0001>

<llo_original>
// kernel: swish.1
$region0: #{swish.1}
  #allocation0 [shape = 'u32[]', space=smem, size = 0x4, offset = 0x4, fixed_abs, tag = 'smem constant byte address 0x4 - core index']
  #allocation1 [shape = 'u32[144,128]{1,0:T(1,128)}', space=vmem, size = 0x12000, scoped, tag = 'internal scratch']
  %s0 = inlined_call_operand.hbm [shape: f32[1,2048], index: 0, kind: input, shape index: {}]
  %s1 = inlined_call_operand.hbm [shape: f32[1,2048], index: 1, kind: output, shape index: {}]
  %s2 = sld [smem:[#allocation0]]
  $region18: #{swish.1} parent=0
    _
  %s4 = ssub.s32 1, %s2
  %s5 = scalar_select 0, %s4, %s2
  $region1: #{swish.1} parent=0
    #allocation2 [shape = 'u8[8192]{0}', space=vmem, size = 0x2000, scoped, tag = 'input window, operand 0, single buffered']
    #allocation3 [shape = 's32[1]{0}', space=sflag, size = 0x4, scoped, tag = 'scoped memory for swish.1']
    #allocation4 [shape = 's32[1]{0}', space=sflag, size = 0x4, scoped, tag = 'scoped memory for swish.1']
    #allocation5 [shape = 'u8[8192]{0}', space=vmem, size = 0x2000, scoped, tag = 'output window, operand 0, single buffered']
    %6 = vsyncpa [#allocation3], 0
    %7 = vsyncpa [#allocation4], 0
    // Predicated region
    $region2: #{swish.1} parent=1 // pred_check
      _
    $region3: #{swish.1} parent=1 // pred_check_branch
      %9 = sbr.rel (0) target = $region5
    $region4: #{swish.1} parent=1 // pred_region
      %s11 = ssub.s32 256, 256
      %12 = vsyncadd [#allocation3], %s11
      %s14 = sshll.u32 [#allocation2], 4
      %s15 = int_to_ptr.vmem [resolvable:$true] %s14
      %17 = dma.hbm_to_vmem [thread:$0]  %s0, 256, %s15, [#allocation3]
    $region5: #{swish.1} parent=1 // pred_fallthru
      _
    // Predicated region
    $region6: #{swish.1} parent=1 // pred_check
      _
    $region7: #{swish.1} parent=1 // pred_check_branch
      %19 = sbr.rel (0) target = $region9
    $region8: #{swish.1} parent=1 // pred_region
      %20 = dma.done [#allocation3], 256
    $region9: #{swish.1} parent=1 // pred_fallthru
      _
    %v21 = vld [vmem:[#allocation2] sm:$0xff]
    %v22 = vld [vmem:[#allocation2 + $0x8] sm:$0xff]
    %v23 = vmul.f32 %v21, 0.5
    %v24 = vmul.f32 %v22, 0.5
    %v25 = vtanh.pop %v23
    %v26 = vtanh.pop %v24
    %v27 = vmul.f32 %v23, %v25
    %v28 = vmul.f32 %v24, %v26
    %v29 = vadd.f32 %v27, %v23
    %v30 = vadd.f32 %v28, %v24
    %31 = vst [vmem:[#allocation5] sm:$0xff] %v29
    %32 = vst [vmem:[#allocation5 + $0x8] sm:$0xff] %v30
    // Predicated region
    $region10: #{swish.1} parent=1 // pred_check
      _
    $region11: #{swish.1} parent=1 // pred_check_branch
      %34 = sbr.rel (0) target = $region13
    $region12: #{swish.1} parent=1 // pred_region
      %s36 = ssub.s32 256, 256
      %37 = vsyncadd [#allocation4], %s36
      %s39 = sshll.u32 [#allocation5], 4
      %s40 = int_to_ptr.vmem [resolvable:$true] %s39
      %42 = dma.vmem_to_hbm [thread:$0]  %s40, 256, %s1, [#allocation4]
    $region13: #{swish.1} parent=1 // pred_fallthru
      _
    // Predicated region
    $region14: #{swish.1} parent=1 // pred_check
      _
    $region15: #{swish.1} parent=1 // pred_check_branch
      %44 = sbr.rel (0) target = $region17
    $region16: #{swish.1} parent=1 // pred_region
      %45 = dma.done [#allocation4], 256
    $region17: #{swish.1} parent=1 // pred_fallthru
      _
    %46 = vsyncpa [#allocation3], 1
    %47 = vsyncpa [#allocation4], 1

</llo_original>
